<compile_context>
chip_gen: v5e
topology: v5e:2x2
jax: 0.10.0
libtpu: 0.0.40
codegen_flags: <defaults>
</compile_context>

<pallas_src>
import jax
import jax.numpy as jnp
from jax.experimental import pallas as pl
from jax.experimental.pallas import tpu as pltpu


def _make_shuffle_kernel(C, g):
    cg = C // g

    def kernel(x_ref, o_ref):
        # x_ref / o_ref: (C, blk_hw) VMEM tiles, lane-dense last dim.
        # Static unrolled per-channel row copies inside VMEM; the HBM<->VMEM
        # traffic on both sides is a dense slab handled by BlockSpec DMA.
        for c_out in range(C):
            c_in = (c_out % g) * cg + (c_out // g)
            o_ref[c_out, :] = x_ref[c_in, :]

    return kernel


def _pick_spatial_block(C, HW, itemsize, target_block_bytes=2 * 1024 * 1024):
    """Largest spatial chunk (multiple of 128 dividing HW) under the target,
    or the full HW if it is small / not 128-divisible (full dim is legal)."""
    if C * HW * itemsize <= target_block_bytes or HW % 128 != 0:
        return HW
    max_lanes = max(128, (target_block_bytes // (C * itemsize)) // 128 * 128)
    blk = 128
    for cand in range(128, min(HW, max_lanes) + 1, 128):
        if HW % cand == 0:
            blk = cand
    return blk


def channel_shuffle(x: jax.Array, groups: int) -> jax.Array:
    """Pallas TPU channel shuffle, NCHW layout (matches PyTorch ChannelShuffle)."""
    N, C, H, W = x.shape
    g = groups
    assert C % g == 0, "channels must be divisible by groups"

    HW = H * W
    itemsize = jnp.dtype(x.dtype).itemsize

    # Flatten spatial dims so H*W is the lane axis (free for contiguous NCHW).
    x2 = x.reshape(N, C, HW)

    blk_hw = _pick_spatial_block(C, HW, itemsize)
    n_hw = HW // blk_hw

    # in + out, double buffered -> ~4x block bytes; leave margin, stay well
    # under v7x's 64 MiB VMEM and above v5e's 16 MiB scoped default when needed.
    block_bytes = C * blk_hw * itemsize
    vmem_limit = int(min(48 * 2**20, max(4 * 2**20, 4 * block_bytes + (1 << 20))))

    # Batch dim squeezed out of the kernel view; block covers full C and a
    # lane-dense spatial chunk (multiple of 128, or the full H*W dim).
    spec = pl.BlockSpec((None, C, blk_hw), lambda n, s: (n, 0, s))

    out = pl.pallas_call(
        _make_shuffle_kernel(C, g),
        out_shape=jax.ShapeDtypeStruct((N, C, HW), x.dtype),
        grid=(N, n_hw),
        in_specs=[spec],
        out_specs=spec,
        compiler_params=pltpu.CompilerParams(
            dimension_semantics=("parallel", "parallel"),
            vmem_limit_bytes=vmem_limit,
        ),
        cost_estimate=pl.CostEstimate(
            flops=0,
            transcendentals=0,
            bytes_accessed=2 * N * C * HW * itemsize,
        ),
    )(x2)

    return out.reshape(N, C, H, W)


def channel_shuffle_ref(x: jax.Array, groups: int) -> jax.Array:
    """Pure-JAX reference matching the PyTorch module exactly."""
    N, C, H, W = x.shape
    g = groups
    return (
        x.reshape(N, g, C // g, H, W)
        .transpose(0, 2, 1, 3, 4)
        .reshape(N, C, H, W)
    )


if __name__ == "__main__":
    key = jax.random.PRNGKey(0)
    k1, k2 = jax.random.split(key)

    # Primary shape implied by the module spec.
    x = jax.random.normal(k1, (2, 4, 16, 16), dtype=jnp.float32)
    out = jax.block_until_ready(channel_shuffle(x, 2))
    ref = channel_shuffle_ref(x, 2)
    assert out.shape == ref.shape and out.dtype == ref.dtype
    assert jnp.array_equal(out, ref), "mismatch vs reference channel shuffle"

    # Second small config: non-power-of-two group count, different spatial size.
    y = jax.random.normal(k2, (1, 6, 8, 16), dtype=jnp.float32)
    out2 = jax.block_until_ready(channel_shuffle(y, 3))
    ref2 = channel_shuffle_ref(y, 3)
    assert jnp.array_equal(out2, ref2), "mismatch vs reference (groups=3)"

    print("KERNEL_OK")
</pallas_src>

<mosaic_0001>
module attributes {stable_mosaic.version = 11 : i64} {
  func.func @kernel(%arg0: i32, %arg1: i32, %arg2: memref<1x4x256xf32, #tpu.memory_space<vmem>>, %arg3: memref<1x4x256xf32, #tpu.memory_space<vmem>>) attributes {dimension_semantics = [#tpu.dimension_semantics<parallel>, #tpu.dimension_semantics<parallel>], iteration_bounds = array<i64: 2, 1>, scalar_prefetch = 0 : i64, scratch_operands = 0 : i64, tpu.core_type = #tpu.core_type<tc>, window_params = [{transform_indices = @transform_0, window_bounds = array<i64: 1, 4, 256>}, {transform_indices = @transform_1, window_bounds = array<i64: 1, 4, 256>}]} {
    %c0 = arith.constant 0 : index
    %c0_0 = arith.constant 0 : index
    %c0_1 = arith.constant 0 : index
    %0 = vector.load %arg2[%c0, %c0_0, %c0_1] : memref<1x4x256xf32, #tpu.memory_space<vmem>>, vector<1x1x256xf32>
    %1 = vector.shape_cast %0 : vector<1x1x256xf32> to vector<256xf32>
    %c0_2 = arith.constant 0 : index
    %c0_3 = arith.constant 0 : index
    %c0_4 = arith.constant 0 : index
    %2 = vector.load %arg3[%c0_2, %c0_3, %c0_4] : memref<1x4x256xf32, #tpu.memory_space<vmem>>, vector<1x1x256xf32>
    %3 = vector.shape_cast %2 : vector<1x1x256xf32> to vector<256xf32>
    %4 = vector.shape_cast %1 : vector<256xf32> to vector<1x1x256xf32>
    tpu.vector_store %arg3[%c0_2, %c0_3, %c0_4], %4 {strides = array<i32>} : memref<1x4x256xf32, #tpu.memory_space<vmem>>, vector<1x1x256xf32>,
    %c0_5 = arith.constant 0 : index
    %c2 = arith.constant 2 : index
    %c0_6 = arith.constant 0 : index
    %5 = vector.load %arg2[%c0_5, %c2, %c0_6] : memref<1x4x256xf32, #tpu.memory_space<vmem>>, vector<1x1x256xf32>
    %6 = vector.shape_cast %5 : vector<1x1x256xf32> to vector<256xf32>
    %c0_7 = arith.constant 0 : index
    %c1 = arith.constant 1 : index
    %c0_8 = arith.constant 0 : index
    %7 = vector.load %arg3[%c0_7, %c1, %c0_8] : memref<1x4x256xf32, #tpu.memory_space<vmem>>, vector<1x1x256xf32>
    %8 = vector.shape_cast %7 : vector<1x1x256xf32> to vector<256xf32>
    %9 = vector.shape_cast %6 : vector<256xf32> to vector<1x1x256xf32>
    tpu.vector_store %arg3[%c0_7, %c1, %c0_8], %9 {strides = array<i32>} : memref<1x4x256xf32, #tpu.memory_space<vmem>>, vector<1x1x256xf32>,
    %c0_9 = arith.constant 0 : index
    %c1_10 = arith.constant 1 : index
    %c0_11 = arith.constant 0 : index
    %10 = vector.load %arg2[%c0_9, %c1_10, %c0_11] : memref<1x4x256xf32, #tpu.memory_space<vmem>>, vector<1x1x256xf32>
    %11 = vector.shape_cast %10 : vector<1x1x256xf32> to vector<256xf32>
    %c0_12 = arith.constant 0 : index
    %c2_13 = arith.constant 2 : index
    %c0_14 = arith.constant 0 : index
    %12 = vector.load %arg3[%c0_12, %c2_13, %c0_14] : memref<1x4x256xf32, #tpu.memory_space<vmem>>, vector<1x1x256xf32>
    %13 = vector.shape_cast %12 : vector<1x1x256xf32> to vector<256xf32>
    %14 = vector.shape_cast %11 : vector<256xf32> to vector<1x1x256xf32>
    tpu.vector_store %arg3[%c0_12, %c2_13, %c0_14], %14 {strides = array<i32>} : memref<1x4x256xf32, #tpu.memory_space<vmem>>, vector<1x1x256xf32>,
    %c0_15 = arith.constant 0 : index
    %c3 = arith.constant 3 : index
    %c0_16 = arith.constant 0 : index
    %15 = vector.load %arg2[%c0_15, %c3, %c0_16] : memref<1x4x256xf32, #tpu.memory_space<vmem>>, vector<1x1x256xf32>
    %16 = vector.shape_cast %15 : vector<1x1x256xf32> to vector<256xf32>
    %c0_17 = arith.constant 0 : index
    %c3_18 = arith.constant 3 : index
    %c0_19 = arith.constant 0 : index
    %17 = vector.load %arg3[%c0_17, %c3_18, %c0_19] : memref<1x4x256xf32, #tpu.memory_space<vmem>>, vector<1x1x256xf32>
    %18 = vector.shape_cast %17 : vector<1x1x256xf32> to vector<256xf32>
    %19 = vector.shape_cast %16 : vector<256xf32> to vector<1x1x256xf32>
    tpu.vector_store %arg3[%c0_17, %c3_18, %c0_19], %19 {strides = array<i32>} : memref<1x4x256xf32, #tpu.memory_space<vmem>>, vector<1x1x256xf32>,
    return
  }
  func.func @transform_0(%arg0: i32, %arg1: i32) -> (i32, i32, i32) {
    %c0_i32 = arith.constant 0 : i32
    %c0_i32_0 = arith.constant 0 : i32
    return %arg0, %c0_i32, %arg1 : i32, i32, i32
  }
  func.func @transform_1(%arg0: i32, %arg1: i32) -> (i32, i32, i32) {
    %c0_i32 = arith.constant 0 : i32
    %c0_i32_0 = arith.constant 0 : i32
    return %arg0, %c0_i32, %arg1 : i32, i32, i32
  }
}

</mosaic_0001>

<llo_original>
// kernel: tpu_custom_call.1
$region0: #{tpu_custom_call.1}
  #allocation0 [shape = 'u32[]', space=smem, size = 0x4, offset = 0x4, fixed_abs, tag = 'smem constant byte address 0x4 - core index']
  #allocation1 [shape = 'u32[72,128]{1,0:T(1,128)}', space=vmem, size = 0x9000, scoped, tag = 'internal scratch']
  %s0 = inlined_call_operand.hbm [shape: f32[2,4,256], index: 0, kind: input, shape index: {}]
  %s1 = inlined_call_operand.hbm [shape: f32[2,4,256], index: 1, kind: output, shape index: {}]
  %s2 = sld [smem:[#allocation0]]
  $region41: #{tpu_custom_call.1} parent=0
    _
  %s4 = ssub.s32 1, %s2
  %s5 = scalar_select 0, %s4, %s2
  $region1: #{tpu_custom_call.1} parent=0
    #allocation2 [shape = 'u8[8192]{0}', space=vmem, size = 0x2000, scoped, tag = 'input window, operand 0']
    #allocation3 [shape = 's32[2]{0}', space=sflag, size = 0x8, scoped, tag = 'scoped memory for tpu_custom_call.1']
    #allocation4 [shape = 's32[2]{0}', space=sflag, size = 0x8, scoped, tag = 'scoped memory for tpu_custom_call.1']
    #allocation5 [shape = 'u8[8192]{0}', space=vmem, size = 0x2000, scoped, tag = 'output window, operand 0']
    %6 = vsyncpa [#allocation3], 0
    %s7 = scalar_lea.sflag [#allocation3], 1
    %8 = vsyncpa %s7, 0
    %9 = vsyncpa [#allocation4], 0
    %s10 = scalar_lea.sflag [#allocation4], 1
    %11 = vsyncpa %s10, 0
    loop: start=0, step=1, limit=4
    $region2: #{tpu_custom_call.1} parent=1 // loop_pre_header
      _
    $region3: #{tpu_custom_call.1} parent=1 // loop_header
      %s13 = sphi 0, %s17
      %p14 = scmp.ge.s32.totalorder %s13, 4
      %s20 = sphi 0, %s32
      %s21 = sphi 0, %s28
      %s22 = sphi 0, %s20
      %s23 = sphi 0, %s21
      %s24 = sphi 0, %s22
      %s25 = sphi 0, %s23
      %s37 = sphi 0, %s39
      %s40 = sphi 0, %s37
      %s41 = sphi 0, %s40
      %s57 = sphi 0, %s41
      %s65 = sphi 0, %s67
      %s68 = sphi 0, %s65
      %s69 = sphi 0, %s68
      %s85 = sphi 0, %s69
    $region4: #{tpu_custom_call.1} parent=1 // loop_header_branch
      %16 = sbr.rel (%p14) target = $region8
    $region5: #{tpu_custom_call.1} parent=1 // loop_body
      %s18 = ssub.s32 %s13, 1
      %s19 = ssub.s32 %s13, 2
      %s26 = sadd.s32 1, %s21
      %p27 = scmp.ge.s32.totalorder %s26, 1
      %s28 = scalar_select %p27, 0, %s26
      %s29 = sadd.s32 1, %s20
      %s30 = scalar_select %p27, %s29, %s20
      %p31 = scmp.ge.s32.totalorder %s30, 2
      %s32 = scalar_select %p31, 0, %s30
      %s33 = ssub.s32 %s20, %s32
      %s34 = ssub.s32 %s21, %s28
      %s35 = sor.u32 %s33, %s34
      %p36 = scmp.eq.s32.totalorder %s35, 0
      %s38 = sadd.s32 %s37, 1
      %s39 = scalar_select %p36, %s37, %s38
      %p42 = pneg %p36
      %p43 = scmp.eq.s32.totalorder %s13, 1
      %p44 = por %p42, %p43
      %p45 = scmp.ne.s32.totalorder %s37, %s40
      %p46 = scmp.eq.s32.totalorder %s13, 0
      %p47 = por %p45, %p46
      %p48 = scmp.ne.s32.totalorder %s37, %s40
      %p49 = scmp.eq.s32.totalorder %s18, 1
      %p50 = por %p48, %p49
      %p51 = scmp.ne.s32.totalorder %s40, %s41
      %p52 = scmp.eq.s32.totalorder %s18, 0
      %p53 = por %p51, %p52
      %p54 = scmp.ne.s32.totalorder %s40, %s41
      %p55 = scmp.eq.s32.totalorder %s19, 1
      %p56 = por %p54, %p55
      %p58 = scmp.ne.s32.totalorder %s41, %s57
      %p59 = scmp.eq.s32.totalorder %s19, 0
      %p60 = por %p58, %p59
      %s61 = ssub.s32 %s20, %s32
      %s62 = ssub.s32 %s21, %s28
      %s63 = sor.u32 %s61, %s62
      %p64 = scmp.eq.s32.totalorder %s63, 0
      %s66 = sadd.s32 %s65, 1
      %s67 = scalar_select %p64, %s65, %s66
      %p70 = pneg %p64
      %p71 = scmp.eq.s32.totalorder %s13, 1
      %p72 = por %p70, %p71
      %p73 = scmp.ne.s32.totalorder %s65, %s68
      %p74 = scmp.eq.s32.totalorder %s13, 0
      %p75 = por %p73, %p74
      %p76 = scmp.ne.s32.totalorder %s65, %s68
      %p77 = scmp.eq.s32.totalorder %s18, 1
      %p78 = por %p76, %p77
      %p79 = scmp.ne.s32.totalorder %s68, %s69
      %p80 = scmp.eq.s32.totalorder %s18, 0
      %p81 = por %p79, %p80
      %p82 = scmp.ne.s32.totalorder %s68, %s69
      %p83 = scmp.eq.s32.totalorder %s19, 1
      %p84 = por %p82, %p83
      %p86 = scmp.ne.s32.totalorder %s69, %s85
      %p87 = scmp.eq.s32.totalorder %s19, 0
      %p88 = por %p86, %p87
      %p89 = scmp.le.s32.totalorder 1, %s13
      %p90 = scmp.lt.s32.totalorder %s13, 3
      %p91 = pnand %p89, %p90
      %p92 = pneg %p91
      // Predicated region
      $region9: #{tpu_custom_call.1} parent=5 // pred_check
        _
      $region10: #{tpu_custom_call.1} parent=5 // pred_check_branch
        %94 = sbr.rel (%p91) target = $region12
      $region11: #{tpu_custom_call.1} parent=5 // pred_region
        %s95 = ssub.s32 %s13, 1
      $region12: #{tpu_custom_call.1} parent=5 // pred_fallthru
        _
      %p96 = scmp.lt.s32.totalorder %s13, 2
      // Predicated region
      $region13: #{tpu_custom_call.1} parent=5 // pred_check
        %p97 = pneg %p96
      $region14: #{tpu_custom_call.1} parent=5 // pred_check_branch
        %99 = sbr.rel (%p97) target = $region16
      $region15: #{tpu_custom_call.1} parent=5 // pred_region
        // Predicated region
        $region17: #{tpu_custom_call.1} parent=15 // pred_check
          %p100 = pneg %p47
        $region18: #{tpu_custom_call.1} parent=15 // pred_check_branch
          %102 = sbr.rel (%p100) target = $region20
        $region19: #{tpu_custom_call.1} parent=15 // pred_region
          %s103 = sand.u32 %s37, 1
          %s104 = scalar_lea.sflag [#allocation3], %s103
          %s105 = sand.u32 %s37, 1
          %s106 = smul.addr %s105, 8
          %s107 = scalar_lea.vmem [#allocation2], %s106
          %s108 = smul.u32 2, %s21
          %110 = vsyncadd %s104, 0
          %s111 = smul.addr %s20, 2
          %s112 = sadd.s32 %s108, %s111
          %s113 = smul.addr %s112, 4
          %s114 = scalar_lea.hbm %s0, %s113
          %s116 = sshll.u32 %s114, 4
          %s117 = int_to_ptr.hbm [resolvable:$true] %s116
          %s118 = sshll.u32 %s107, 4
          %s119 = int_to_ptr.vmem [resolvable:$true] %s118
          %121 = dma.hbm_to_vmem [thread:$0]  %s117, 128, %s119, %s104
        $region20: #{tpu_custom_call.1} parent=15 // pred_fallthru
          _
      $region16: #{tpu_custom_call.1} parent=5 // pred_fallthru
        _
      %p122 = scmp.le.s32.totalorder 1, %s13
      %p123 = scmp.lt.s32.totalorder %s13, 3
      %p124 = pnand %p122, %p123
      %p125 = pneg %p124
      // Predicated region
      $region21: #{tpu_custom_call.1} parent=5 // pred_check
        _
      $region22: #{tpu_custom_call.1} parent=5 // pred_check_branch
        %127 = sbr.rel (%p124) target = $region24
      $region23: #{tpu_custom_call.1} parent=5 // pred_region
        %s128 = ssub.s32 %s13, 1
        %s129 = sand.u32 %s40, 1
        %s130 = scalar_lea.sflag [#allocation3], %s129
        %s131 = sand.u32 %s40, 1
        %s132 = smul.addr %s131, 8
        %s133 = scalar_lea.vmem [#allocation2], %s132
        // Predicated region
        $region25: #{tpu_custom_call.1} parent=23 // pred_check
          %p134 = pneg %p53
        $region26: #{tpu_custom_call.1} parent=23 // pred_check_branch
          %136 = sbr.rel (%p134) target = $region28
        $region27: #{tpu_custom_call.1} parent=23 // pred_region
          %138 = dma.done %s130, 128
        $region28: #{tpu_custom_call.1} parent=23 // pred_fallthru
          _
        %s139 = sand.u32 %s40, 1
        %s140 = scalar_lea.sflag [#allocation3], %s139
        %s141 = sand.u32 %s40, 1
        %s142 = smul.addr %s141, 8
        %s143 = scalar_lea.vmem [#allocation2], %s142
        %p144 = pneg %p53
        %p145 = pneg %p50
        %p146 = pneg %p81
        %p147 = pneg %p78
        %s148 = sand.u32 %s68, 1
        %s149 = scalar_lea.sflag [#allocation4], %s148
        %s150 = sand.u32 %s68, 1
        %s151 = smul.addr %s150, 8
        %s152 = scalar_lea.vmem [#allocation5], %s151
        %s153 = smul.u32 2, %s23
        %s154 = smul.u32 2, %s23
        %v155 = vld [vmem:[%s133] ss:$4 sm:$0x3]
        %v156 = vlaneseq
        %vm157 = vcmp.ge.s32.totalorder %v156, 0
        %vm158 = vcmp.lt.s32.totalorder %v156, 256
        %vm159 = vmand %vm157, %vm158
        %160 = vst.msk [vmem:[%s152] ss:$4 sm:$0x3] %vm159, %v155
        %s161 = scalar_lea.vmem %s133, 2 [#allocation2]
        %v162 = vld [vmem:[%s161] ss:$4 sm:$0x3]
        %s163 = scalar_lea.vmem %s152, 1 [#allocation5]
        %164 = vst.msk [vmem:[%s163] ss:$4 sm:$0x3] %vm159, %v162
        %s165 = scalar_lea.vmem %s133, 1 [#allocation2]
        %v166 = vld [vmem:[%s165] ss:$4 sm:$0x3]
        %s167 = scalar_lea.vmem %s152, 2 [#allocation5]
        %168 = vst.msk [vmem:[%s167] ss:$4 sm:$0x3] %vm159, %v166
        %s169 = scalar_lea.vmem %s133, 3 [#allocation2]
        %v170 = vld [vmem:[%s169] ss:$4 sm:$0x3]
        %s171 = scalar_lea.vmem %s152, 3 [#allocation5]
        %172 = vst.msk [vmem:[%s171] ss:$4 sm:$0x3] %vm159, %v170
        %s173 = sand.u32 %s68, 1
        %s174 = scalar_lea.sflag [#allocation4], %s173
        %s175 = sand.u32 %s68, 1
        %s176 = smul.addr %s175, 8
        %s177 = scalar_lea.vmem [#allocation5], %s176
        // Predicated region
        $region29: #{tpu_custom_call.1} parent=23 // pred_check
          %p178 = pneg %p78
        $region30: #{tpu_custom_call.1} parent=23 // pred_check_branch
          %180 = sbr.rel (%p178) target = $region32
        $region31: #{tpu_custom_call.1} parent=23 // pred_region
          %s181 = smul.u32 2, %s23
          %183 = vsyncadd %s174, 0
          %s184 = smul.addr %s22, 2
          %s185 = sadd.s32 %s181, %s184
          %s186 = smul.addr %s185, 4
          %s187 = scalar_lea.hbm %s1, %s186
          %s189 = sshll.u32 %s177, 4
          %s190 = int_to_ptr.vmem [resolvable:$true] %s189
          %s191 = sshll.u32 %s187, 4
          %s192 = int_to_ptr.hbm [resolvable:$true] %s191
          %194 = dma.vmem_to_hbm [thread:$0]  %s190, 128, %s192, %s174
        $region32: #{tpu_custom_call.1} parent=23 // pred_fallthru
          _
      $region24: #{tpu_custom_call.1} parent=5 // pred_fallthru
        _
      %p195 = scmp.le.s32.totalorder 2, %s13
      // Predicated region
      $region33: #{tpu_custom_call.1} parent=5 // pred_check
        %p196 = pneg %p195
      $region34: #{tpu_custom_call.1} parent=5 // pred_check_branch
        %198 = sbr.rel (%p196) target = $region36
      $region35: #{tpu_custom_call.1} parent=5 // pred_region
        %s199 = ssub.s32 %s13, 2
        // Predicated region
        $region37: #{tpu_custom_call.1} parent=35 // pred_check
          %p200 = pneg %p84
        $region38: #{tpu_custom_call.1} parent=35 // pred_check_branch
          %202 = sbr.rel (%p200) target = $region40
        $region39: #{tpu_custom_call.1} parent=35 // pred_region
          %s203 = sand.u32 %s69, 1
          %s204 = scalar_lea.sflag [#allocation4], %s203
          %s205 = sand.u32 %s69, 1
          %s206 = smul.addr %s205, 8
          %s207 = scalar_lea.vmem [#allocation5], %s206
          %209 = dma.done %s204, 128
        $region40: #{tpu_custom_call.1} parent=35 // pred_fallthru
          _
      $region36: #{tpu_custom_call.1} parent=5 // pred_fallthru
        _
    $region6: #{tpu_custom_call.1} parent=1 // loop_footer
      %s17 = sadd.s32 1, %s13
    $region7: #{tpu_custom_call.1} parent=1 // loop_footer_branch
      %12 = sbr.rel target = $region3
    $region8: #{tpu_custom_call.1} parent=1 // loop_exit
      _
    %210 = vsyncpa [#allocation3], 1
    %s211 = scalar_lea.sflag [#allocation3], 1
    %212 = vsyncpa %s211, 1
    %213 = vsyncpa [#allocation4], 1
    %s214 = scalar_lea.sflag [#allocation4], 1
    %215 = vsyncpa %s214, 1

</llo_original>
